<compile_context>
chip_gen: v7x
topology: tpu7x:2x2x1
jax: 0.10.0
libtpu: 0.0.40
codegen_flags: <defaults>
</compile_context>

<pallas_src>
import jax
import jax.numpy as jnp
from jax.experimental import pallas as pl
from jax.experimental.pallas import tpu as pltpu

BN_EPS = 1e-5


def _round_up(n: int, m: int) -> int:
    return (n + m - 1) // m * m


def _linear_model_kernel(x_ref, w1_ref, b1_ref, w2_ref, b2_ref, w3_ref, b3_ref,
                         mask_ref, out_ref):
    # x tile arrives f32 from HBM; cast to bf16 so the MXU runs its fast path.
    # All matmuls accumulate in f32.
    x = x_ref[...].astype(jnp.bfloat16)

    # Linear(500->100) + ReLU   (eval-mode BN already folded into W2/b2)
    h1 = jnp.dot(x, w1_ref[...], preferred_element_type=jnp.float32) + b1_ref[...]
    h1 = jnp.maximum(h1, 0.0)

    # Linear(100->50) + ReLU    (W2/b2 carry the folded BatchNorm)
    h2 = jnp.dot(h1.astype(jnp.bfloat16), w2_ref[...],
                 preferred_element_type=jnp.float32) + b2_ref[...]
    h2 = jnp.maximum(h2, 0.0)

    # Linear(50->num_labels) + ReLU
    h3 = jnp.dot(h2.astype(jnp.bfloat16), w3_ref[...],
                 preferred_element_type=jnp.float32) + b3_ref[...]
    h3 = jnp.maximum(h3, 0.0)

    # Additive mask (-1e30 on padded label lanes), then numerically stable softmax.
    h3 = h3 + mask_ref[...]
    m = jnp.max(h3, axis=-1, keepdims=True)
    e = jnp.exp(h3 - m)
    denom = jnp.sum(e, axis=-1, keepdims=True)
    out_ref[...] = e * pl.reciprocal(denom, approx=True)


def prepare_params(params):
    """One-time prep (hoist out of the per-call path): fold eval-mode BatchNorm1d(100)
    into W2/b2, zero-pad feature/label dims to 128 lanes, cast weights to bf16, and
    build the additive label mask. Returns (prepared_dict, num_labels)."""
    K, H1 = params["w1"].shape          # 500, 100
    H2 = params["w2"].shape[1]          # 50
    L = params["w3"].shape[1]           # num_labels

    # Fold BN (it sits after ReLU(h1), before Linear2, so it is a pure affine fold).
    scale = params["gamma"] / jnp.sqrt(params["running_var"] + BN_EPS)   # (1, 100)
    shift = params["beta"] - params["running_mean"] * scale              # (1, 100)
    w2_f = scale.reshape(-1, 1) * params["w2"]                           # (100, 50)
    b2_f = params["b2"] + shift @ params["w2"]                           # (1, 50)

    N1, N2, Lp = _round_up(H1, 128), _round_up(H2, 128), _round_up(L, 128)

    def pad2(a, r, c, dtype):
        a = a.astype(jnp.float32)
        return jnp.pad(a, ((0, r - a.shape[0]), (0, c - a.shape[1]))).astype(dtype)

    prep = {
        "w1": pad2(params["w1"], K, N1, jnp.bfloat16),    # (500, 128) bf16
        "b1": pad2(params["b1"], 1, N1, jnp.float32),     # (1, 128)
        "w2": pad2(w2_f, N1, N2, jnp.bfloat16),           # (128, 128) bf16 (BN folded)
        "b2": pad2(b2_f, 1, N2, jnp.float32),             # (1, 128)
        "w3": pad2(params["w3"], N2, Lp, jnp.bfloat16),   # (128, 128) bf16
        "b3": pad2(params["b3"], 1, Lp, jnp.float32),     # (1, 128)
        "mask": jnp.where(jnp.arange(Lp) < L, 0.0, -1e30)
                   .astype(jnp.float32).reshape(1, Lp),   # (1, 128)
    }
    return prep, L


def linear_model_forward(x, prep, *, max_tile_b: int = 2048):
    """Batch-tiled Pallas GEMM chain. Returns padded probabilities of shape (B, 128);
    slice [:, :num_labels] outside if the padded layout can't be consumed directly."""
    B, K = x.shape                       # K = 500 (unpadded; full-dim last axis block)
    Lp = prep["w3"].shape[1]

    # Batch tiling: no batch padding. For large B give >= 2 grid steps so v7x's second
    # TensorCore has work; ragged last block (if any) is handled by Pallas (OOB writes
    # dropped).
    n_tiles = max(pl.cdiv(B, max_tile_b), 2 if B >= 256 else 1)
    tile_b = pl.cdiv(B, n_tiles)
    if tile_b < B:
        tile_b = _round_up(tile_b, 8)    # multi-block grid needs sublane-aligned tiles
    grid = (pl.cdiv(B, tile_b),)

    const = lambda i: (0, 0)             # weights/biases/mask: same block every step
                                         # -> DMA'd once, VMEM-resident across the grid

    out = pl.pallas_call(
        _linear_model_kernel,
        out_shape=jax.ShapeDtypeStruct((B, Lp), jnp.float32),
        grid=grid,
        in_specs=[
            pl.BlockSpec((tile_b, K), lambda i: (i, 0)),          # unpadded x, pipelined
            pl.BlockSpec(prep["w1"].shape, const),
            pl.BlockSpec(prep["b1"].shape, const),
            pl.BlockSpec(prep["w2"].shape, const),
            pl.BlockSpec(prep["b2"].shape, const),
            pl.BlockSpec(prep["w3"].shape, const),
            pl.BlockSpec(prep["b3"].shape, const),
            pl.BlockSpec(prep["mask"].shape, const),
        ],
        out_specs=pl.BlockSpec((tile_b, Lp), lambda i: (i, 0)),
        compiler_params=pltpu.CompilerParams(dimension_semantics=("parallel",)),
    )(x.astype(jnp.float32), prep["w1"], prep["b1"], prep["w2"], prep["b2"],
      prep["w3"], prep["b3"], prep["mask"])
    return out


def init_params(key, num_labels):
    """Deterministic parameter init matching the shapes of the PyTorch module."""
    k1, k2, k3, k4, k5, k6 = jax.random.split(key, 6)

    def lin(kw, kb, fan_in, fan_out):
        bound = 1.0 / jnp.sqrt(fan_in)
        w = jax.random.uniform(kw, (fan_in, fan_out), jnp.float32, -bound, bound)
        b = jax.random.uniform(kb, (1, fan_out), jnp.float32, -bound, bound)
        return w, b

    w1, b1 = lin(k1, k2, 500, 100)
    w2, b2 = lin(k3, k4, 100, 50)
    w3, b3 = lin(k5, k6, 50, num_labels)
    return {
        "w1": w1, "b1": b1,
        "w2": w2, "b2": b2,
        "w3": w3, "b3": b3,
        # BatchNorm1d(100): non-default values so the BN fold is actually exercised.
        "gamma": 1.0 + 0.1 * jax.random.normal(jax.random.PRNGKey(10), (1, 100), jnp.float32),
        "beta": 0.05 * jax.random.normal(jax.random.PRNGKey(11), (1, 100), jnp.float32),
        "running_mean": 0.1 * jax.random.normal(jax.random.PRNGKey(12), (1, 100), jnp.float32),
        "running_var": jnp.abs(1.0 + 0.1 * jax.random.normal(jax.random.PRNGKey(13),
                                                             (1, 100), jnp.float32)),
    }


def _reference_forward(x, p):
    """Pure-JAX f32 reference (unfolded BN) for correctness checking."""
    h1 = jnp.maximum(x @ p["w1"] + p["b1"], 0.0)
    h1 = (h1 - p["running_mean"]) / jnp.sqrt(p["running_var"] + BN_EPS) * p["gamma"] + p["beta"]
    h2 = jnp.maximum(h1 @ p["w2"] + p["b2"], 0.0)
    h3 = jnp.maximum(h2 @ p["w3"] + p["b3"], 0.0)
    return jax.nn.softmax(h3, axis=-1)


if __name__ == "__main__":
    num_labels = 4
    batch = 8

    key = jax.random.PRNGKey(0)
    kx, kp = jax.random.split(key)
    x = jax.random.normal(kx, (batch, 500), jnp.float32)
    params = init_params(kp, num_labels)

    # One-time fold/pad/cast (hoisted out of the per-call path).
    prep, L = prepare_params(params)

    out_padded = linear_model_forward(x, prep)
    out_padded = jax.block_until_ready(out_padded)
    out = out_padded[:, :L]   # downstream code that accepts 128-lane padded probs skips this

    ref = _reference_forward(x, params)
    assert out.shape == (batch, num_labels)
    # bf16 MXU inputs (f32 accumulation) + approx reciprocal -> slightly loose tolerance.
    assert jnp.allclose(out, ref, atol=5e-3, rtol=5e-3), "mismatch vs reference"
    assert jnp.allclose(jnp.sum(out, axis=-1), 1.0, atol=2e-3), "softmax rows must sum to ~1"

    print("KERNEL_OK")
</pallas_src>

<mosaic_0001>
module attributes {stable_mosaic.version = 11 : i64} {
  func.func @_linear_model_kernel(%arg0: i32, %arg1: memref<8x500xf32, #tpu.memory_space<vmem>>, %arg2: memref<500x128xbf16, #tpu.memory_space<vmem>>, %arg3: memref<1x128xf32, #tpu.memory_space<vmem>>, %arg4: memref<128x128xbf16, #tpu.memory_space<vmem>>, %arg5: memref<1x128xf32, #tpu.memory_space<vmem>>, %arg6: memref<128x128xbf16, #tpu.memory_space<vmem>>, %arg7: memref<1x128xf32, #tpu.memory_space<vmem>>, %arg8: memref<1x128xf32, #tpu.memory_space<vmem>>, %arg9: memref<8x128xf32, #tpu.memory_space<vmem>>) attributes {dimension_semantics = [#tpu.dimension_semantics<parallel>], iteration_bounds = array<i64: 1>, scalar_prefetch = 0 : i64, scratch_operands = 0 : i64, tpu.core_type = #tpu.core_type<tc>, window_params = [{transform_indices = @transform_0, window_bounds = array<i64: 8, 500>}, {pipeline_mode = #tpu.pipeline_mode<synchronous>, transform_indices = @transform_1, window_bounds = array<i64: 500, 128>}, {pipeline_mode = #tpu.pipeline_mode<synchronous>, transform_indices = @transform_2, window_bounds = array<i64: 1, 128>}, {pipeline_mode = #tpu.pipeline_mode<synchronous>, transform_indices = @transform_3, window_bounds = array<i64: 128, 128>}, {pipeline_mode = #tpu.pipeline_mode<synchronous>, transform_indices = @transform_4, window_bounds = array<i64: 1, 128>}, {pipeline_mode = #tpu.pipeline_mode<synchronous>, transform_indices = @transform_5, window_bounds = array<i64: 128, 128>}, {pipeline_mode = #tpu.pipeline_mode<synchronous>, transform_indices = @transform_6, window_bounds = array<i64: 1, 128>}, {pipeline_mode = #tpu.pipeline_mode<synchronous>, transform_indices = @transform_7, window_bounds = array<i64: 1, 128>}, {transform_indices = @transform_8, window_bounds = array<i64: 8, 128>}]} {
    %c0 = arith.constant 0 : index
    %c0_0 = arith.constant 0 : index
    %0 = vector.load %arg1[%c0, %c0_0] : memref<8x500xf32, #tpu.memory_space<vmem>>, vector<8x500xf32>
    %1 = arith.truncf %0 : vector<8x500xf32> to vector<8x500xbf16>
    %c0_1 = arith.constant 0 : index
    %c0_2 = arith.constant 0 : index
    %2 = vector.load %arg2[%c0_1, %c0_2] : memref<500x128xbf16, #tpu.memory_space<vmem>>, vector<500x128xbf16>
    %cst = arith.constant dense<0.000000e+00> : vector<8x128xf32>
    %3 = tpu.matmul %1, %2, %cst {dimension_numbers = #tpu.dot_dimension_numbers<[1], [0], [0], [1], [0, 0, 1, 1], [], []>} : vector<8x500xbf16>, vector<500x128xbf16>, vector<8x128xf32> -> vector<8x128xf32>
    %c0_3 = arith.constant 0 : index
    %c0_4 = arith.constant 0 : index
    %4 = vector.load %arg3[%c0_3, %c0_4] : memref<1x128xf32, #tpu.memory_space<vmem>>, vector<1x128xf32>
    %5 = vector.broadcast %4 : vector<1x128xf32> to vector<8x128xf32>
    %6 = arith.addf %3, %5 : vector<8x128xf32>
    %cst_5 = arith.constant 0.000000e+00 : f32
    %7 = vector.broadcast %cst_5 : f32 to vector<8x128xf32>
    %8 = arith.maximumf %6, %7 : vector<8x128xf32>
    %9 = arith.truncf %8 : vector<8x128xf32> to vector<8x128xbf16>
    %c0_6 = arith.constant 0 : index
    %c0_7 = arith.constant 0 : index
    %10 = vector.load %arg4[%c0_6, %c0_7] : memref<128x128xbf16, #tpu.memory_space<vmem>>, vector<128x128xbf16>
    %cst_8 = arith.constant dense<0.000000e+00> : vector<8x128xf32>
    %11 = tpu.matmul %9, %10, %cst_8 {dimension_numbers = #tpu.dot_dimension_numbers<[1], [0], [0], [1], [0, 0, 1, 1], [], []>} : vector<8x128xbf16>, vector<128x128xbf16>, vector<8x128xf32> -> vector<8x128xf32>
    %c0_9 = arith.constant 0 : index
    %c0_10 = arith.constant 0 : index
    %12 = vector.load %arg5[%c0_9, %c0_10] : memref<1x128xf32, #tpu.memory_space<vmem>>, vector<1x128xf32>
    %13 = vector.broadcast %12 : vector<1x128xf32> to vector<8x128xf32>
    %14 = arith.addf %11, %13 : vector<8x128xf32>
    %cst_11 = arith.constant 0.000000e+00 : f32
    %15 = vector.broadcast %cst_11 : f32 to vector<8x128xf32>
    %16 = arith.maximumf %14, %15 : vector<8x128xf32>
    %17 = arith.truncf %16 : vector<8x128xf32> to vector<8x128xbf16>
    %c0_12 = arith.constant 0 : index
    %c0_13 = arith.constant 0 : index
    %18 = vector.load %arg6[%c0_12, %c0_13] : memref<128x128xbf16, #tpu.memory_space<vmem>>, vector<128x128xbf16>
    %cst_14 = arith.constant dense<0.000000e+00> : vector<8x128xf32>
    %19 = tpu.matmul %17, %18, %cst_14 {dimension_numbers = #tpu.dot_dimension_numbers<[1], [0], [0], [1], [0, 0, 1, 1], [], []>} : vector<8x128xbf16>, vector<128x128xbf16>, vector<8x128xf32> -> vector<8x128xf32>
    %c0_15 = arith.constant 0 : index
    %c0_16 = arith.constant 0 : index
    %20 = vector.load %arg7[%c0_15, %c0_16] : memref<1x128xf32, #tpu.memory_space<vmem>>, vector<1x128xf32>
    %21 = vector.broadcast %20 : vector<1x128xf32> to vector<8x128xf32>
    %22 = arith.addf %19, %21 : vector<8x128xf32>
    %cst_17 = arith.constant 0.000000e+00 : f32
    %23 = vector.broadcast %cst_17 : f32 to vector<8x128xf32>
    %24 = arith.maximumf %22, %23 : vector<8x128xf32>
    %c0_18 = arith.constant 0 : index
    %c0_19 = arith.constant 0 : index
    %25 = vector.load %arg8[%c0_18, %c0_19] : memref<1x128xf32, #tpu.memory_space<vmem>>, vector<1x128xf32>
    %26 = vector.broadcast %25 : vector<1x128xf32> to vector<8x128xf32>
    %27 = arith.addf %24, %26 : vector<8x128xf32>
    %cst_20 = arith.constant dense<0xFF800000> : vector<8xf32>
    %28 = vector.multi_reduction <maximumf>, %27, %cst_20 [1] : vector<8x128xf32> to vector<8xf32>
    %29 = vector.shape_cast %28 : vector<8xf32> to vector<8x1xf32>
    %30 = vector.broadcast %29 : vector<8x1xf32> to vector<8x128xf32>
    %31 = arith.subf %27, %30 : vector<8x128xf32>
    %32 = math.exp %31 : vector<8x128xf32>
    %cst_21 = arith.constant dense<0.000000e+00> : vector<8xf32>
    %33 = vector.multi_reduction <add>, %32, %cst_21 [1] : vector<8x128xf32> to vector<8xf32>
    %34 = vector.shape_cast %33 : vector<8xf32> to vector<8x1xf32>
    %35 = tpu.reciprocal %34 {approx = true} : vector<8x1xf32> -> vector<8x1xf32>
    %36 = vector.broadcast %35 : vector<8x1xf32> to vector<8x128xf32>
    %37 = arith.mulf %32, %36 : vector<8x128xf32>
    %c0_22 = arith.constant 0 : index
    %c0_23 = arith.constant 0 : index
    %38 = vector.load %arg9[%c0_22, %c0_23] : memref<8x128xf32, #tpu.memory_space<vmem>>, vector<8x128xf32>
    tpu.vector_store %arg9[%c0_22, %c0_23], %37 {strides = array<i32>} : memref<8x128xf32, #tpu.memory_space<vmem>>, vector<8x128xf32>,
    return
  }
  func.func @transform_0(%arg0: i32) -> (i32, i32) {
    %c0_i32 = arith.constant 0 : i32
    %c0_i32_0 = arith.constant 0 : i32
    return %arg0, %c0_i32 : i32, i32
  }
  func.func @transform_1(%arg0: i32) -> (i32, i32) {
    %c0_i32 = arith.constant 0 : i32
    %c0_i32_0 = arith.constant 0 : i32
    %c0_i32_1 = arith.constant 0 : i32
    return %c0_i32, %c0_i32_0 : i32, i32
  }
  func.func @transform_2(%arg0: i32) -> (i32, i32) {
    %c0_i32 = arith.constant 0 : i32
    %c0_i32_0 = arith.constant 0 : i32
    %c0_i32_1 = arith.constant 0 : i32
    return %c0_i32, %c0_i32_0 : i32, i32
  }
  func.func @transform_3(%arg0: i32) -> (i32, i32) {
    %c0_i32 = arith.constant 0 : i32
    %c0_i32_0 = arith.constant 0 : i32
    %c0_i32_1 = arith.constant 0 : i32
    return %c0_i32, %c0_i32_0 : i32, i32
  }
  func.func @transform_4(%arg0: i32) -> (i32, i32) {
    %c0_i32 = arith.constant 0 : i32
    %c0_i32_0 = arith.constant 0 : i32
    %c0_i32_1 = arith.constant 0 : i32
    return %c0_i32, %c0_i32_0 : i32, i32
  }
  func.func @transform_5(%arg0: i32) -> (i32, i32) {
    %c0_i32 = arith.constant 0 : i32
    %c0_i32_0 = arith.constant 0 : i32
    %c0_i32_1 = arith.constant 0 : i32
    return %c0_i32, %c0_i32_0 : i32, i32
  }
  func.func @transform_6(%arg0: i32) -> (i32, i32) {
    %c0_i32 = arith.constant 0 : i32
    %c0_i32_0 = arith.constant 0 : i32
    %c0_i32_1 = arith.constant 0 : i32
    return %c0_i32, %c0_i32_0 : i32, i32
  }
  func.func @transform_7(%arg0: i32) -> (i32, i32) {
    %c0_i32 = arith.constant 0 : i32
    %c0_i32_0 = arith.constant 0 : i32
    %c0_i32_1 = arith.constant 0 : i32
    return %c0_i32, %c0_i32_0 : i32, i32
  }
  func.func @transform_8(%arg0: i32) -> (i32, i32) {
    %c0_i32 = arith.constant 0 : i32
    %c0_i32_0 = arith.constant 0 : i32
    return %arg0, %c0_i32 : i32, i32
  }
}

</mosaic_0001>

<llo_original>
// kernel: tpu_custom_call.1
$region0: #{tpu_custom_call.1}
  #allocation0 [shape = 'u32[]', space=smem, size = 0x4, offset = 0x4, fixed_abs, tag = 'smem constant byte address 0x4 - core index']
  #allocation1 [shape = 'u32[144,128]{1,0:T(1,128)}', space=vmem, size = 0x12000, scoped, tag = 'internal scratch']
  %s0 = inlined_call_operand.hbm [shape: f32[8,500], index: 0, kind: input, shape index: {}]
  %s1 = inlined_call_operand.hbm [shape: bf16[500,128], index: 1, kind: input, shape index: {}]
  %s2 = inlined_call_operand.vmem [shape: f32[1,128], index: 2, kind: input, shape index: {}]
  %s3 = inlined_call_operand.hbm [shape: bf16[128,128], index: 3, kind: input, shape index: {}]
  %s4 = inlined_call_operand.vmem [shape: f32[1,128], index: 4, kind: input, shape index: {}]
  %s5 = inlined_call_operand.hbm [shape: bf16[128,128], index: 5, kind: input, shape index: {}]
  %s6 = inlined_call_operand.vmem [shape: f32[1,128], index: 6, kind: input, shape index: {}]
  %s7 = inlined_call_operand.vmem [shape: f32[1,128], index: 7, kind: input, shape index: {}]
  %s8 = inlined_call_operand.hbm [shape: f32[8,128], index: 8, kind: output, shape index: {}]
  %s9 = sld [smem:[#allocation0]]
  $region58: #{tpu_custom_call.1} parent=0
    _
  %s11 = ssub.s32 1, %s9
  %s12 = scalar_select 0, %s11, %s9
  $region1: #{tpu_custom_call.1} parent=0
    #allocation2 [shape = 'u8[16384]{0}', space=vmem, size = 0x4000, scoped, tag = 'input window, operand 0, single buffered']
    #allocation3 [shape = 's32[1]{0}', space=sflag, size = 0x4, scoped, tag = 'scoped memory for tpu_custom_call.1']
    #allocation4 [shape = 's32[1]{0}', space=sflag, size = 0x4, scoped, tag = 'scoped memory for tpu_custom_call.1']
    #allocation5 [shape = 'u8[129024]{0}', space=vmem, size = 0x1f800, scoped, tag = 'input window, operand 1, single buffered']
    #allocation6 [shape = 's32[1]{0}', space=sflag, size = 0x4, scoped, tag = 'scoped memory for tpu_custom_call.1']
    #allocation7 [shape = 'u8[32768]{0}', space=vmem, size = 0x8000, scoped, tag = 'input window, operand 3, single buffered']
    #allocation8 [shape = 'u8[32768]{0}', space=vmem, size = 0x8000, scoped, tag = 'input window, operand 5, single buffered']
    #allocation9 [shape = 's32[1]{0}', space=sflag, size = 0x4, scoped, tag = 'scoped memory for tpu_custom_call.1']
    #allocation10 [shape = 'u8[4096]{0}', space=vmem, size = 0x1000, scoped, tag = 'output window, operand 0, single buffered']
    %13 = vsyncpa [#allocation3], 0
    %14 = vsyncpa [#allocation6], 0
    %15 = vsyncpa [#allocation9], 0
    %16 = vsyncpa [#allocation4], 0
    // Predicated region
    $region2: #{tpu_custom_call.1} parent=1 // pred_check
      _
    $region3: #{tpu_custom_call.1} parent=1 // pred_check_branch
      %18 = sbr.rel (0) target = $region5
    $region4: #{tpu_custom_call.1} parent=1 // pred_region
      %s20 = ssub.s32 512, 512
      %21 = vsyncadd [#allocation3], %s20
      %s23 = sshll.u32 [#allocation2], 4
      %s24 = int_to_ptr.vmem [resolvable:$true] %s23
      %26 = dma.hbm_to_vmem [thread:$0]  %s0, 512, %s24, [#allocation3]
    $region5: #{tpu_custom_call.1} parent=1 // pred_fallthru
      _
    // Predicated region
    $region6: #{tpu_custom_call.1} parent=1 // pred_check
      _
    $region7: #{tpu_custom_call.1} parent=1 // pred_check_branch
      %28 = sbr.rel (0) target = $region9
    $region8: #{tpu_custom_call.1} parent=1 // pred_region
      %s30 = ssub.s32 4032, 4032
      %31 = vsyncadd [#allocation6], %s30
      %s32 = sshll.u32 [#allocation5], 4
      %s33 = int_to_ptr.vmem [resolvable:$true] %s32
      %38 = dma.hbm_to_vmem [thread:$0]  %s1, 4032, %s33, [#allocation6], 64, 64, 4
    $region9: #{tpu_custom_call.1} parent=1 // pred_fallthru
      _
    // Predicated region
    $region10: #{tpu_custom_call.1} parent=1 // pred_check
      _
    $region11: #{tpu_custom_call.1} parent=1 // pred_check_branch
      %40 = sbr.rel (0) target = $region13
    $region12: #{tpu_custom_call.1} parent=1 // pred_region
      _
    $region13: #{tpu_custom_call.1} parent=1 // pred_fallthru
      _
    // Predicated region
    $region14: #{tpu_custom_call.1} parent=1 // pred_check
      _
    $region15: #{tpu_custom_call.1} parent=1 // pred_check_branch
      %42 = sbr.rel (0) target = $region17
    $region16: #{tpu_custom_call.1} parent=1 // pred_region
      %s44 = ssub.s32 1024, 1024
      %45 = vsyncadd [#allocation6], %s44
      %s46 = sshll.u32 [#allocation7], 4
      %s47 = int_to_ptr.vmem [resolvable:$true] %s46
      %52 = dma.hbm_to_vmem [thread:$0]  %s3, 1024, %s47, [#allocation6], 64, 64, 4
    $region17: #{tpu_custom_call.1} parent=1 // pred_fallthru
      _
    // Predicated region
    $region18: #{tpu_custom_call.1} parent=1 // pred_check
      _
    $region19: #{tpu_custom_call.1} parent=1 // pred_check_branch
      %54 = sbr.rel (0) target = $region21
    $region20: #{tpu_custom_call.1} parent=1 // pred_region
      _
    $region21: #{tpu_custom_call.1} parent=1 // pred_fallthru
      _
    // Predicated region
    $region22: #{tpu_custom_call.1} parent=1 // pred_check
      _
    $region23: #{tpu_custom_call.1} parent=1 // pred_check_branch
      %56 = sbr.rel (0) target = $region25
    $region24: #{tpu_custom_call.1} parent=1 // pred_region
      %s58 = ssub.s32 1024, 1024
      %59 = vsyncadd [#allocation9], %s58
      %s60 = sshll.u32 [#allocation8], 4
      %s61 = int_to_ptr.vmem [resolvable:$true] %s60
      %66 = dma.hbm_to_vmem [thread:$0]  %s5, 1024, %s61, [#allocation9], 64, 64, 4
    $region25: #{tpu_custom_call.1} parent=1 // pred_fallthru
      _
    // Predicated region
    $region26: #{tpu_custom_call.1} parent=1 // pred_check
      _
    $region27: #{tpu_custom_call.1} parent=1 // pred_check_branch
      %68 = sbr.rel (0) target = $region29
    $region28: #{tpu_custom_call.1} parent=1 // pred_region
      _
    $region29: #{tpu_custom_call.1} parent=1 // pred_fallthru
      _
    // Predicated region
    $region30: #{tpu_custom_call.1} parent=1 // pred_check
      _
    $region31: #{tpu_custom_call.1} parent=1 // pred_check_branch
      %70 = sbr.rel (0) target = $region33
    $region32: #{tpu_custom_call.1} parent=1 // pred_region
      _
    $region33: #{tpu_custom_call.1} parent=1 // pred_fallthru
      _
    // Predicated region
    $region34: #{tpu_custom_call.1} parent=1 // pred_check
      _
    $region35: #{tpu_custom_call.1} parent=1 // pred_check_branch
      %72 = sbr.rel (0) target = $region37
    $region36: #{tpu_custom_call.1} parent=1 // pred_region
      %73 = dma.done [#allocation3], 512
    $region37: #{tpu_custom_call.1} parent=1 // pred_fallthru
      _
    // Predicated region
    $region38: #{tpu_custom_call.1} parent=1 // pred_check
      _
    $region39: #{tpu_custom_call.1} parent=1 // pred_check_branch
      %75 = sbr.rel (0) target = $region41
    $region40: #{tpu_custom_call.1} parent=1 // pred_region
      %76 = dma.done [#allocation6], 4032
    $region41: #{tpu_custom_call.1} parent=1 // pred_fallthru
      _
    // Predicated region
    $region42: #{tpu_custom_call.1} parent=1 // pred_check
      _
    $region43: #{tpu_custom_call.1} parent=1 // pred_check_branch
      %78 = sbr.rel (0) target = $region45
    $region44: #{tpu_custom_call.1} parent=1 // pred_region
      %79 = dma.done [#allocation6], 1024
    $region45: #{tpu_custom_call.1} parent=1 // pred_fallthru
      _
    // Predicated region
    $region46: #{tpu_custom_call.1} parent=1 // pred_check
      _
    $region47: #{tpu_custom_call.1} parent=1 // pred_check_branch
      %81 = sbr.rel (0) target = $region49
    $region48: #{tpu_custom_call.1} parent=1 // pred_region
      %82 = dma.done [#allocation9], 1024
    $region49: #{tpu_custom_call.1} parent=1 // pred_fallthru
      _
    %v84 = vld [vmem:[#allocation2] sm:$0xff]
    %v85 = vld [vmem:[#allocation2 + $0x8] sm:$0xff]
    %v86 = vld [vmem:[#allocation2 + $0x10] sm:$0xff]
    %v87 = vld [vmem:[#allocation2 + $0x18] sm:$0xff]
    %v88 = vpack.c.bf16 %v84, %v84
    %v89 = vpack.c.bf16 %v85, %v85
    %v90 = vpack.c.bf16 %v86, %v86
    %v91 = vpack.c.bf16 %v87, %v87
    %v92 = vld [vmem:[#allocation5] sm:$0xf]
    %v93 = vld [vmem:[#allocation5 + $0x4] sm:$0xf]
    %v94 = vld [vmem:[#allocation5 + $0x8] sm:$0xf]
    %v95 = vld [vmem:[#allocation5 + $0xc] sm:$0xf]
    %v96 = vld [vmem:[#allocation5 + $0x10] sm:$0xf]
    %v97 = vld [vmem:[#allocation5 + $0x14] sm:$0xf]
    %v98 = vld [vmem:[#allocation5 + $0x18] sm:$0xf]
    %v99 = vld [vmem:[#allocation5 + $0x1c] sm:$0xf]
    %v100 = vld [vmem:[#allocation5 + $0x20] sm:$0xf]
    %v101 = vld [vmem:[#allocation5 + $0x24] sm:$0xf]
    %v102 = vld [vmem:[#allocation5 + $0x28] sm:$0xf]
    %v103 = vld [vmem:[#allocation5 + $0x2c] sm:$0xf]
    %v104 = vld [vmem:[#allocation5 + $0x30] sm:$0xf]
    %v105 = vld [vmem:[#allocation5 + $0x34] sm:$0xf]
    %v106 = vld [vmem:[#allocation5 + $0x38] sm:$0xf]
    %v107 = vld [vmem:[#allocation5 + $0x3c] sm:$0xf]
    %v108 = vld [vmem:[#allocation5 + $0x40] sm:$0xf]
    %v109 = vld [vmem:[#allocation5 + $0x44] sm:$0xf]
    %v110 = vld [vmem:[#allocation5 + $0x48] sm:$0xf]
    %v111 = vld [vmem:[#allocation5 + $0x4c] sm:$0xf]
    %v112 = vld [vmem:[#allocation5 + $0x50] sm:$0xf]
    %v113 = vld [vmem:[#allocation5 + $0x54] sm:$0xf]
    %v114 = vld [vmem:[#allocation5 + $0x58] sm:$0xf]
    %v115 = vld [vmem:[#allocation5 + $0x5c] sm:$0xf]
    %v116 = vld [vmem:[#allocation5 + $0x60] sm:$0xf]
    %v117 = vld [vmem:[#allocation5 + $0x64] sm:$0xf]
    %v118 = vld [vmem:[#allocation5 + $0x68] sm:$0xf]
    %v119 = vld [vmem:[#allocation5 + $0x6c] sm:$0xf]
    %v120 = vld [vmem:[#allocation5 + $0x70] sm:$0xf]
    %v121 = vld [vmem:[#allocation5 + $0x74] sm:$0xf]
    %v122 = vld [vmem:[#allocation5 + $0x78] sm:$0xf]
    %v123 = vld [vmem:[#allocation5 + $0x7c] sm:$0xf]
    %v124 = vld [vmem:[#allocation5 + $0x80] sm:$0xf]
    %v125 = vld [vmem:[#allocation5 + $0x84] sm:$0xf]
    %v126 = vld [vmem:[#allocation5 + $0x88] sm:$0xf]
    %v127 = vld [vmem:[#allocation5 + $0x8c] sm:$0xf]
    %v128 = vld [vmem:[#allocation5 + $0x90] sm:$0xf]
    %v129 = vld [vmem:[#allocation5 + $0x94] sm:$0xf]
    %v130 = vld [vmem:[#allocation5 + $0x98] sm:$0xf]
    %v131 = vld [vmem:[#allocation5 + $0x9c] sm:$0xf]
    %v132 = vld [vmem:[#allocation5 + $0xa0] sm:$0xf]
    %v133 = vld [vmem:[#allocation5 + $0xa4] sm:$0xf]
    %v134 = vld [vmem:[#allocation5 + $0xa8] sm:$0xf]
    %v135 = vld [vmem:[#allocation5 + $0xac] sm:$0xf]
    %v136 = vld [vmem:[#allocation5 + $0xb0] sm:$0xf]
    %v137 = vld [vmem:[#allocation5 + $0xb4] sm:$0xf]
    %v138 = vld [vmem:[#allocation5 + $0xb8] sm:$0xf]
    %v139 = vld [vmem:[#allocation5 + $0xbc] sm:$0xf]
    %v140 = vld [vmem:[#allocation5 + $0xc0] sm:$0xf]
    %v141 = vld [vmem:[#allocation5 + $0xc4] sm:$0xf]
    %v142 = vld [vmem:[#allocation5 + $0xc8] sm:$0xf]
    %v143 = vld [vmem:[#allocation5 + $0xcc] sm:$0xf]
    %v144 = vld [vmem:[#allocation5 + $0xd0] sm:$0xf]
    %v145 = vld [vmem:[#allocation5 + $0xd4] sm:$0xf]
    %v146 = vld [vmem:[#allocation5 + $0xd8] sm:$0xf]
    %v147 = vld [vmem:[#allocation5 + $0xdc] sm:$0xf]
    %v148 = vld [vmem:[#allocation5 + $0xe0] sm:$0xf]
    %v149 = vld [vmem:[#allocation5 + $0xe4] sm:$0xf]
    %v150 = vld [vmem:[#allocation5 + $0xe8] sm:$0xf]
    %v151 = vld [vmem:[#allocation5 + $0xec] sm:$0xf]
    %v152 = vld [vmem:[#allocation5 + $0xf0] sm:$0xf]
    %v153 = vld [vmem:[#allocation5 + $0xf4] sm:$0xf]
    %v154 = vld [vmem:[#allocation5 + $0xf8] sm:$0x3]
    %v155 = vld [vmem:[%s2] sm:$0x1]
    %v157 = vlaneseq
    %v158 = vshrl.u32 %v157, 7
    %v159 = vsub.s32 0, %v158
    %v160 = vrot.slane %v155, %v159
    %v225 = vunpack.c.l.b16 %v92
    %v226 = vunpack.c.l.b16 %v93
    %v227 = vunpack.c.l.b16 %v94
    %v228 = vunpack.c.l.b16 %v95
    %v229 = vunpack.c.l.b16 %v96
    %v230 = vunpack.c.l.b16 %v97
    %v231 = vunpack.c.l.b16 %v98
    %v232 = vunpack.c.l.b16 %v99
    %v233 = vunpack.c.l.b16 %v100
    %v234 = vunpack.c.l.b16 %v101
    %v235 = vunpack.c.l.b16 %v102
    %v236 = vunpack.c.l.b16 %v103
    %v237 = vunpack.c.l.b16 %v104
    %v238 = vunpack.c.l.b16 %v105
    %v239 = vunpack.c.l.b16 %v106
    %v240 = vunpack.c.l.b16 %v107
    %v241 = vunpack.c.l.b16 %v108
    %v242 = vunpack.c.l.b16 %v109
    %v243 = vunpack.c.l.b16 %v110
    %v244 = vunpack.c.l.b16 %v111
    %v245 = vunpack.c.l.b16 %v112
    %v246 = vunpack.c.l.b16 %v113
    %v247 = vunpack.c.l.b16 %v114
    %v248 = vunpack.c.l.b16 %v115
    %v249 = vunpack.c.l.b16 %v116
    %v250 = vunpack.c.l.b16 %v117
    %v251 = vunpack.c.l.b16 %v118
    %v252 = vunpack.c.l.b16 %v119
    %v253 = vunpack.c.l.b16 %v120
    %v254 = vunpack.c.l.b16 %v121
    %v255 = vunpack.c.l.b16 %v122
    %v256 = vunpack.c.l.b16 %v123
    %v257 = vunpack.c.l.b16 %v124
    %v258 = vunpack.c.l.b16 %v125
    %v259 = vunpack.c.l.b16 %v126
    %v260 = vunpack.c.l.b16 %v127
    %v261 = vunpack.c.l.b16 %v128
    %v262 = vunpack.c.l.b16 %v129
    %v263 = vunpack.c.l.b16 %v130
    %v264 = vunpack.c.l.b16 %v131
    %v265 = vunpack.c.l.b16 %v132
    %v266 = vunpack.c.l.b16 %v133
    %v267 = vunpack.c.l.b16 %v134
    %v268 = vunpack.c.l.b16 %v135
    %v269 = vunpack.c.l.b16 %v136
    %v270 = vunpack.c.l.b16 %v137
    %v271 = vunpack.c.l.b16 %v138
    %v272 = vunpack.c.l.b16 %v139
    %v273 = vunpack.c.l.b16 %v140
    %v274 = vunpack.c.l.b16 %v141
    %v275 = vunpack.c.l.b16 %v142
    %v276 = vunpack.c.l.b16 %v143
    %v277 = vunpack.c.l.b16 %v144
    %v278 = vunpack.c.l.b16 %v145
    %v279 = vunpack.c.l.b16 %v146
    %v280 = vunpack.c.l.b16 %v147
    %v281 = vunpack.c.l.b16 %v148
    %v282 = vunpack.c.l.b16 %v149
    %v283 = vunpack.c.l.b16 %v150
    %v284 = vunpack.c.l.b16 %v151
    %v285 = vunpack.c.l.b16 %v152
    %v286 = vunpack.c.l.b16 %v153
    %v287 = vunpack.c.l.b16 %v154
    %v288 = vpack.c.b16 %v226, %v225
    %v289 = vpack.c.b16 %v228, %v227
    %v290 = vpack.c.b16 %v230, %v229
    %v291 = vpack.c.b16 %v232, %v231
    %v292 = vpack.c.b16 %v234, %v233
    %v293 = vpack.c.b16 %v236, %v235
    %v294 = vpack.c.b16 %v238, %v237
    %v295 = vpack.c.b16 %v240, %v239
    %v296 = vpack.c.b16 %v242, %v241
    %v297 = vpack.c.b16 %v244, %v243
    %v298 = vpack.c.b16 %v246, %v245
    %v299 = vpack.c.b16 %v248, %v247
    %v300 = vpack.c.b16 %v250, %v249
    %v301 = vpack.c.b16 %v252, %v251
    %v302 = vpack.c.b16 %v254, %v253
    %v303 = vpack.c.b16 %v256, %v255
    %v304 = vpack.c.b16 %v258, %v257
    %v305 = vpack.c.b16 %v260, %v259
    %v306 = vpack.c.b16 %v262, %v261
    %v307 = vpack.c.b16 %v264, %v263
    %v308 = vpack.c.b16 %v266, %v265
    %v309 = vpack.c.b16 %v268, %v267
    %v310 = vpack.c.b16 %v270, %v269
    %v311 = vpack.c.b16 %v272, %v271
    %v312 = vpack.c.b16 %v274, %v273
    %v313 = vpack.c.b16 %v276, %v275
    %v314 = vpack.c.b16 %v278, %v277
    %v315 = vpack.c.b16 %v280, %v279
    %v316 = vpack.c.b16 %v282, %v281
    %v317 = vpack.c.b16 %v284, %v283
    %v318 = vpack.c.b16 %v286, %v285
    %v319 = vpack.c.b16 %v287, %v287
    %vm351 = vcmask 949248
    %v353 = vsel %vm351, %v91, 0
    %vm355 = vcmask 1041408
    %v357 = vsel %vm355, %v319, 0
    %359 = vmatprep.subr.bf16.mxu0 0
    %360 = vmatpush1.bf16.msra.mxu0 %v288
    %361 = vmatprep.subr.bf16.mxu0 0
    %362 = vmatpush1.bf16.msra.mxu0 %v289
    %363 = vmatprep.subr.bf16.mxu0 0
    %364 = vmatpush1.bf16.msra.mxu0 %v290
    %365 = vmatprep.subr.bf16.mxu0 0
    %366 = vmatpush1.bf16.msra.mxu0 %v291
    %367 = vmatprep.subr.bf16.mxu0 0
    %368 = vmatpush1.bf16.msra.mxu0 %v292
    %369 = vmatprep.subr.bf16.mxu0 0
    %370 = vmatpush1.bf16.msra.mxu0 %v293
    %371 = vmatprep.subr.bf16.mxu0 0
    %372 = vmatpush1.bf16.msra.mxu0 %v294
    %373 = vmatprep.subr.bf16.mxu0 0
    %374 = vmatpush1.bf16.msra.mxu0 %v295
    %375 = vmatprep.subr.bf16.mxu0 0
    %376 = vmatpush1.bf16.msra.mxu0 %v296
    %377 = vmatprep.subr.bf16.mxu0 0
    %378 = vmatpush1.bf16.msra.mxu0 %v297
    %379 = vmatprep.subr.bf16.mxu0 0
    %380 = vmatpush1.bf16.msra.mxu0 %v298
    %381 = vmatprep.subr.bf16.mxu0 0
    %382 = vmatpush1.bf16.msra.mxu0 %v299
    %383 = vmatprep.subr.bf16.mxu0 0
    %384 = vmatpush1.bf16.msra.mxu0 %v300
    %385 = vmatprep.subr.bf16.mxu0 0
    %386 = vmatpush1.bf16.msra.mxu0 %v301
    %387 = vmatprep.subr.bf16.mxu0 0
    %388 = vmatpush1.bf16.msra.mxu0 %v302
    %389 = vmatprep.subr.bf16.mxu0 0
    %390 = vmatpush1.bf16.msra.mxu0 %v303
    %391 = vmatprep.mubr.bf16.mxu0 %v89
    %392 = vmatmul.mubr.bf16.gmra.mrb[0].mxu0 %v88
    %v393 = vpop.f32.mrb[0].mxu0
    %v394 = vadd.f32 %v160, %v393
    %v395 = vpop.f32.mrb[0].mxu0
    %v396 = vpop.f32.mrb[0].mxu0
    %v397 = vpop.f32.mrb[0].mxu0
    %398 = vdwg.mxu0
    %399 = vmatprep.subr.bf16.mxu0 0
    %400 = vmatpush1.bf16.msra.mxu0 %v304
    %401 = vmatprep.subr.bf16.mxu0 0
    %402 = vmatpush1.bf16.msra.mxu0 %v305
    %403 = vmatprep.subr.bf16.mxu0 0
    %404 = vmatpush1.bf16.msra.mxu0 %v306
    %405 = vmatprep.subr.bf16.mxu0 0
    %406 = vmatpush1.bf16.msra.mxu0 %v307
    %407 = vmatprep.subr.bf16.mxu0 0
    %408 = vmatpush1.bf16.msra.mxu0 %v308
    %409 = vmatprep.subr.bf16.mxu0 0
    %410 = vmatpush1.bf16.msra.mxu0 %v309
    %411 = vmatprep.subr.bf16.mxu0 0
    %412 = vmatpush1.bf16.msra.mxu0 %v310
    %413 = vmatprep.subr.bf16.mxu0 0
    %414 = vmatpush1.bf16.msra.mxu0 %v311
    %415 = vmatprep.subr.bf16.mxu0 0
    %416 = vmatpush1.bf16.msra.mxu0 %v312
    %417 = vmatprep.subr.bf16.mxu0 0
    %418 = vmatpush1.bf16.msra.mxu0 %v313
    %419 = vmatprep.subr.bf16.mxu0 0
    %420 = vmatpush1.bf16.msra.mxu0 %v314
    %421 = vmatprep.subr.bf16.mxu0 0
    %422 = vmatpush1.bf16.msra.mxu0 %v315
    %423 = vmatprep.subr.bf16.mxu0 0
    %424 = vmatpush1.bf16.msra.mxu0 %v316
    %425 = vmatprep.subr.bf16.mxu0 0
    %426 = vmatpush1.bf16.msra.mxu0 %v317
    %427 = vmatprep.subr.bf16.mxu0 0
    %428 = vmatpush1.bf16.msra.mxu0 %v318
    %429 = vmatprep.subr.bf16.mxu0 0
    %430 = vmatpush1.bf16.msra.mxu0 %v357
    %431 = vmatprep.mubr.bf16.mxu0 %v353
    %432 = vmatmul.mubr.bf16.gmra.mrb[0].mxu0 %v90
    %v433 = vpop.f32.mrb[0].mxu0
    %v434 = vadd.f32 %v394, %v433
    %v435 = vpop.f32.mrb[0].mxu0
    %v436 = vpop.f32.mrb[0].mxu0
    %v437 = vpop.f32.mrb[0].mxu0
    %438 = vdwg.mxu0
    %v439 = vmax.f32 %v434, 0.0
    %v440 = vpack.c.bf16 %v439, %v439
    %v441 = vld [vmem:[#allocation7] sm:$0xf]
    %v442 = vld [vmem:[#allocation7 + $0x4] sm:$0xf]
    %v443 = vld [vmem:[#allocation7 + $0x8] sm:$0xf]
    %v444 = vld [vmem:[#allocation7 + $0xc] sm:$0xf]
    %v445 = vld [vmem:[#allocation7 + $0x10] sm:$0xf]
    %v446 = vld [vmem:[#allocation7 + $0x14] sm:$0xf]
    %v447 = vld [vmem:[#allocation7 + $0x18] sm:$0xf]
    %v448 = vld [vmem:[#allocation7 + $0x1c] sm:$0xf]
    %v449 = vld [vmem:[#allocation7 + $0x20] sm:$0xf]
    %v450 = vld [vmem:[#allocation7 + $0x24] sm:$0xf]
    %v451 = vld [vmem:[#allocation7 + $0x28] sm:$0xf]
    %v452 = vld [vmem:[#allocation7 + $0x2c] sm:$0xf]
    %v453 = vld [vmem:[#allocation7 + $0x30] sm:$0xf]
    %v454 = vld [vmem:[#allocation7 + $0x34] sm:$0xf]
    %v455 = vld [vmem:[#allocation7 + $0x38] sm:$0xf]
    %v456 = vld [vmem:[#allocation7 + $0x3c] sm:$0xf]
    %v457 = vld [vmem:[%s4] sm:$0x1]
    %v459 = vlaneseq
    %v460 = vshrl.u32 %v459, 7
    %v461 = vsub.s32 0, %v460
    %v462 = vrot.slane %v457, %v461
    %v480 = vunpack.c.l.b16 %v441
    %v481 = vunpack.c.l.b16 %v442
    %v482 = vunpack.c.l.b16 %v443
    %v483 = vunpack.c.l.b16 %v444
    %v484 = vunpack.c.l.b16 %v445
    %v485 = vunpack.c.l.b16 %v446
    %v486 = vunpack.c.l.b16 %v447
    %v487 = vunpack.c.l.b16 %v448
    %v488 = vunpack.c.l.b16 %v449
    %v489 = vunpack.c.l.b16 %v450
    %v490 = vunpack.c.l.b16 %v451
    %v491 = vunpack.c.l.b16 %v452
    %v492 = vunpack.c.l.b16 %v453
    %v493 = vunpack.c.l.b16 %v454
    %v494 = vunpack.c.l.b16 %v455
    %v495 = vunpack.c.l.b16 %v456
    %v496 = vpack.c.b16 %v481, %v480
    %v497 = vpack.c.b16 %v483, %v482
    %v498 = vpack.c.b16 %v485, %v484
    %v499 = vpack.c.b16 %v487, %v486
    %v500 = vpack.c.b16 %v489, %v488
    %v501 = vpack.c.b16 %v491, %v490
    %v502 = vpack.c.b16 %v493, %v492
    %v503 = vpack.c.b16 %v495, %v494
    %512 = vmatprep.subr.bf16.mxu0 0
    %513 = vmatpush1.bf16.msra.mxu0 %v496
    %514 = vmatprep.subr.bf16.mxu0 0
    %515 = vmatpush1.bf16.msra.mxu0 %v497
    %516 = vmatprep.subr.bf16.mxu0 0
    %517 = vmatpush1.bf16.msra.mxu0 %v498
    %518 = vmatprep.subr.bf16.mxu0 0
    %519 = vmatpush1.bf16.msra.mxu0 %v499
    %520 = vmatprep.subr.bf16.mxu0 0
    %521 = vmatpush1.bf16.msra.mxu0 %v500
    %522 = vmatprep.subr.bf16.mxu0 0
    %523 = vmatpush1.bf16.msra.mxu0 %v501
    %524 = vmatprep.subr.bf16.mxu0 0
    %525 = vmatpush1.bf16.msra.mxu0 %v502
    %526 = vmatprep.subr.bf16.mxu0 0
    %527 = vmatpush1.bf16.msra.mxu0 %v503
    %528 = vmatprep.subr.bf16.mxu0 0
    %529 = vmatpush1.bf16.msra.mxu0 0
    %530 = vmatprep.subr.bf16.mxu0 0
    %531 = vmatpush1.bf16.msra.mxu0 0
    %532 = vmatprep.subr.bf16.mxu0 0
    %533 = vmatpush1.bf16.msra.mxu0 0
    %534 = vmatprep.subr.bf16.mxu0 0
    %535 = vmatpush1.bf16.msra.mxu0 0
    %536 = vmatprep.subr.bf16.mxu0 0
    %537 = vmatpush1.bf16.msra.mxu0 0
    %538 = vmatprep.subr.bf16.mxu0 0
    %539 = vmatpush1.bf16.msra.mxu0 0
    %540 = vmatprep.subr.bf16.mxu0 0
    %541 = vmatpush1.bf16.msra.mxu0 0
    %542 = vmatprep.subr.bf16.mxu0 0
    %543 = vmatpush1.bf16.msra.mxu0 0
    %544 = vmatprep.mubr.bf16.mxu0 0
    %545 = vmatmul.mubr.bf16.gmra.mrb[0].mxu0 %v440
    %v546 = vpop.f32.mrb[0].mxu0
    %v547 = vadd.f32 %v462, %v546
    %v548 = vpop.f32.mrb[0].mxu0
    %v549 = vpop.f32.mrb[0].mxu0
    %v550 = vpop.f32.mrb[0].mxu0
    %551 = vdwg.mxu0
    %v552 = vmax.f32 %v547, 0.0
    %v553 = vpack.c.bf16 %v552, %v552
    %v554 = vld [vmem:[#allocation8] sm:$0xf]
    %v555 = vld [vmem:[#allocation8 + $0x4] sm:$0xf]
    %v556 = vld [vmem:[#allocation8 + $0x8] sm:$0xf]
    %v557 = vld [vmem:[#allocation8 + $0xc] sm:$0xf]
    %v558 = vld [vmem:[#allocation8 + $0x10] sm:$0xf]
    %v559 = vld [vmem:[#allocation8 + $0x14] sm:$0xf]
    %v560 = vld [vmem:[#allocation8 + $0x18] sm:$0xf]
    %v561 = vld [vmem:[#allocation8 + $0x1c] sm:$0xf]
    %v562 = vld [vmem:[#allocation8 + $0x20] sm:$0xf]
    %v563 = vld [vmem:[#allocation8 + $0x24] sm:$0xf]
    %v564 = vld [vmem:[#allocation8 + $0x28] sm:$0xf]
    %v565 = vld [vmem:[#allocation8 + $0x2c] sm:$0xf]
    %v566 = vld [vmem:[#allocation8 + $0x30] sm:$0xf]
    %v567 = vld [vmem:[#allocation8 + $0x34] sm:$0xf]
    %v568 = vld [vmem:[#allocation8 + $0x38] sm:$0xf]
    %v569 = vld [vmem:[#allocation8 + $0x3c] sm:$0xf]
    %v570 = vld [vmem:[%s6] sm:$0x1]
    %v572 = vlaneseq
    %v573 = vshrl.u32 %v572, 7
    %v574 = vsub.s32 0, %v573
    %v575 = vrot.slane %v570, %v574
    %v593 = vunpack.c.l.b16 %v554
    %v594 = vunpack.c.l.b16 %v555
    %v595 = vunpack.c.l.b16 %v556
    %v596 = vunpack.c.l.b16 %v557
    %v597 = vunpack.c.l.b16 %v558
    %v598 = vunpack.c.l.b16 %v559
    %v599 = vunpack.c.l.b16 %v560
    %v600 = vunpack.c.l.b16 %v561
    %v601 = vunpack.c.l.b16 %v562
    %v602 = vunpack.c.l.b16 %v563
    %v603 = vunpack.c.l.b16 %v564
    %v604 = vunpack.c.l.b16 %v565
    %v605 = vunpack.c.l.b16 %v566
    %v606 = vunpack.c.l.b16 %v567
    %v607 = vunpack.c.l.b16 %v568
    %v608 = vunpack.c.l.b16 %v569
    %v609 = vpack.c.b16 %v594, %v593
    %v610 = vpack.c.b16 %v596, %v595
    %v611 = vpack.c.b16 %v598, %v597
    %v612 = vpack.c.b16 %v600, %v599
    %v613 = vpack.c.b16 %v602, %v601
    %v614 = vpack.c.b16 %v604, %v603
    %v615 = vpack.c.b16 %v606, %v605
    %v616 = vpack.c.b16 %v608, %v607
    %625 = vmatprep.subr.bf16.mxu0 0
    %626 = vmatpush1.bf16.msra.mxu0 %v609
    %627 = vmatprep.subr.bf16.mxu0 0
    %628 = vmatpush1.bf16.msra.mxu0 %v610
    %629 = vmatprep.subr.bf16.mxu0 0
    %630 = vmatpush1.bf16.msra.mxu0 %v611
    %631 = vmatprep.subr.bf16.mxu0 0
    %632 = vmatpush1.bf16.msra.mxu0 %v612
    %633 = vmatprep.subr.bf16.mxu0 0
    %634 = vmatpush1.bf16.msra.mxu0 %v613
    %635 = vmatprep.subr.bf16.mxu0 0
    %636 = vmatpush1.bf16.msra.mxu0 %v614
    %637 = vmatprep.subr.bf16.mxu0 0
    %638 = vmatpush1.bf16.msra.mxu0 %v615
    %639 = vmatprep.subr.bf16.mxu0 0
    %640 = vmatpush1.bf16.msra.mxu0 %v616
    %641 = vmatprep.subr.bf16.mxu0 0
    %642 = vmatpush1.bf16.msra.mxu0 0
    %643 = vmatprep.subr.bf16.mxu0 0
    %644 = vmatpush1.bf16.msra.mxu0 0
    %645 = vmatprep.subr.bf16.mxu0 0
    %646 = vmatpush1.bf16.msra.mxu0 0
    %647 = vmatprep.subr.bf16.mxu0 0
    %648 = vmatpush1.bf16.msra.mxu0 0
    %649 = vmatprep.subr.bf16.mxu0 0
    %650 = vmatpush1.bf16.msra.mxu0 0
    %651 = vmatprep.subr.bf16.mxu0 0
    %652 = vmatpush1.bf16.msra.mxu0 0
    %653 = vmatprep.subr.bf16.mxu0 0
    %654 = vmatpush1.bf16.msra.mxu0 0
    %655 = vmatprep.subr.bf16.mxu0 0
    %656 = vmatpush1.bf16.msra.mxu0 0
    %657 = vmatprep.mubr.bf16.mxu0 0
    %658 = vmatmul.mubr.bf16.gmra.mrb[0].mxu0 %v553
    %v659 = vpop.f32.mrb[0].mxu0
    %v660 = vadd.f32 %v575, %v659
    %v661 = vpop.f32.mrb[0].mxu0
    %v662 = vpop.f32.mrb[0].mxu0
    %v663 = vpop.f32.mrb[0].mxu0
    %664 = vdwg.mxu0
    %v665 = vmax.f32 %v660, 0.0
    %v666 = vld [vmem:[%s7] sm:$0x1]
    %v668 = vlaneseq
    %v669 = vshrl.u32 %v668, 7
    %v670 = vsub.s32 0, %v669
    %v671 = vrot.slane %v666, %v670
    %v673 = vadd.f32 %v665, %v671
    %674 = vmax.xlane.f32.xlu0 %v673
    %v675 = vpop.xlane.xlu0 %674
    %v676 = vsub.f32 %v673, %v675
    %v677 = vmul.f32 %v676, 1.442695
    %v678 = vpow.pop %v677
    %679 = vadd.xlane.f32.xlu0 %v678
    %v680 = vpop.xlane.xlu0 %679
    %v681 = vrcp.pop %v680
    %v682 = vmul.f32 %v678, %v681
    %683 = vst [vmem:[#allocation10] sm:$0xff] %v682
    // Predicated region
    $region50: #{tpu_custom_call.1} parent=1 // pred_check
      _
    $region51: #{tpu_custom_call.1} parent=1 // pred_check_branch
      %685 = sbr.rel (0) target = $region53
    $region52: #{tpu_custom_call.1} parent=1 // pred_region
      %s687 = ssub.s32 128, 128
      %688 = vsyncadd [#allocation4], %s687
      %s690 = sshll.u32 [#allocation10], 4
      %s691 = int_to_ptr.vmem [resolvable:$true] %s690
      %693 = dma.vmem_to_hbm [thread:$0]  %s691, 128, %s8, [#allocation4]
    $region53: #{tpu_custom_call.1} parent=1 // pred_fallthru
      _
    // Predicated region
    $region54: #{tpu_custom_call.1} parent=1 // pred_check
      _
    $region55: #{tpu_custom_call.1} parent=1 // pred_check_branch
      %695 = sbr.rel (0) target = $region57
    $region56: #{tpu_custom_call.1} parent=1 // pred_region
      %696 = dma.done [#allocation4], 128
    $region57: #{tpu_custom_call.1} parent=1 // pred_fallthru
      _
    %697 = vsyncpa [#allocation3], 1
    %698 = vsyncpa [#allocation6], 1
    %699 = vsyncpa [#allocation9], 1
    %700 = vsyncpa [#allocation4], 1

</llo_original>
